<compile_context>
chip_gen: v7x
topology: tpu7x:2x2x1
jax: 0.10.0
libtpu: 0.0.40
codegen_flags: <defaults>
</compile_context>

<pallas_src>
import functools
import math

import jax
import jax.numpy as jnp
from jax import lax
from jax.experimental import pallas as pl
from jax.experimental.pallas import tpu as pltpu


def _pe_add_dropout_kernel(seed_ref, x_ref, pe_ref, o_ref, *,
                           p_drop, training,
                           row_c0, row_c1, col_c0, col_c1, row_stride):
    """out = dropout(x + pe) on one 2-D block.

    x_ref : (tr, tc) block of the 2-D view of x
    pe_ref: (tr, tc) or (1, tc) block of the 2-D view of pe (broadcasts).
    Global element index of out[i, j] is
        (row_c0*pid0 + row_c1*pid1 + i) * row_stride + (col_c0*pid0 + col_c1*pid1 + j)
    """
    y = x_ref[...] + pe_ref[...]

    if training and p_drop >= 1.0:
        # Degenerate p=1.0: everything dropped (avoids inf scale).
        o_ref[...] = jnp.zeros_like(o_ref)
        return

    if training and p_drop > 0.0:
        i0 = pl.program_id(0).astype(jnp.uint32)
        i1 = pl.program_id(1).astype(jnp.uint32)
        rows = lax.broadcasted_iota(jnp.uint32, y.shape, 0)
        cols = lax.broadcasted_iota(jnp.uint32, y.shape, 1)
        g_row = jnp.uint32(row_c0) * i0 + jnp.uint32(row_c1) * i1 + rows
        g_col = jnp.uint32(col_c0) * i0 + jnp.uint32(col_c1) * i1 + cols
        # NOTE: flat index wraps mod 2^32 for >4.3e9-element activations
        # (statistical correlation only; fine for realistic shapes).
        h = g_row * jnp.uint32(row_stride & 0xFFFFFFFF) + g_col
        h = h + seed_ref[0].astype(jnp.uint32) * jnp.uint32(0x9E3779B9)
        # Cheap single-multiply mixer (half of lowbias32): good avalanche,
        # ~40% fewer VALU ops than the murmur3 finalizer.
        h = h ^ (h >> 16)
        h = h * jnp.uint32(0x7FEB352D)
        h = h ^ (h >> 15)
        threshold = jnp.uint32(min(int(p_drop * float(2 ** 32)), 2 ** 32 - 1))
        keep = h >= threshold                         # P(keep) = 1 - p
        scale = jnp.float32(1.0 / (1.0 - p_drop))     # rescale in f32
        y = jnp.where(keep, y.astype(jnp.float32) * scale, jnp.float32(0.0))

    o_ref[...] = y.astype(o_ref.dtype)


def make_sinusoidal_pe(d_model, max_seq_length, dtype=jnp.float32):
    """Builds the module's fixed pe buffer: (1, max_seq_length, d_model)."""
    position = jnp.arange(max_seq_length, dtype=jnp.float32)[:, None]
    div_term = jnp.exp(
        jnp.arange(0, d_model, 2, dtype=jnp.float32) * (-math.log(10000.0) / d_model)
    )
    pe = jnp.zeros((max_seq_length, d_model), dtype=jnp.float32)
    pe = pe.at[:, 0::2].set(jnp.sin(position * div_term))
    pe = pe.at[:, 1::2].set(jnp.cos(position * div_term))
    return pe[None, :, :].astype(dtype)


def _pick_row_tile(S, B, D, itemsize, budget_bytes):
    """Largest multiple-of-8 divisor of S fitting the byte budget, shrunk if
    needed so the grid has a few steps (keeps both v7x TensorCores busy)."""
    cands = [t for t in range(8, S + 1, 8) if S % t == 0]
    fit = [t for t in cands if t * D * itemsize <= budget_bytes] or [cands[0]]
    tr = max(fit)
    while (S // tr) * B < 4:
        smaller = [t for t in fit if t < tr]
        if not smaller:
            break
        tr = max(smaller)
    return tr


def _pick_lane_tiles(B, L, itemsize, budget_bytes):
    """(row_tile, lane_tile) for the flattened (B, S*D) view; lane tile is a
    multiple-of-128 divisor of L when one exists (no ragged masked tile)."""
    tB = B if B <= 256 else 256                      # full dim or multiple of 8
    max_lanes = max(128, (budget_bytes // (tB * itemsize)) // 128 * 128)
    tL = None
    start = min(max_lanes, (L // 128) * 128)
    for cand in range(start, 0, -128):
        if L % cand == 0:
            tL = cand
            break
    if tL is None:                                   # L < 128 or no clean divisor
        tL = L if L <= max_lanes else max_lanes
    return tB, tL


def positional_encoding(x, pe, *, p_drop=0.1, training=False, seed=0):
    """Forward pass of PositionalEncoding: dropout(x + pe[:, :S])."""
    B, S, D = x.shape
    max_S = pe.shape[1]
    if S > max_S:
        raise ValueError(f"seq_len {S} exceeds max_seq_length {max_S}")

    dtype = x.dtype
    itemsize = jnp.dtype(dtype).itemsize
    pe_sd = pe if S == max_S else pe[:, :S, :]

    use_row_view = (D % 128 == 0) and (S % 8 == 0)

    if use_row_view:
        # (B*S, D) view: full (8,128) vregs even for tiny batches.
        R = B * S
        x2 = x.reshape(R, D)
        pe2 = pe_sd.reshape(S, D).astype(dtype)      # match x dtype on host
        budget = 2 * 1024 * 1024                     # pe blocks are block-sized too
        tr = _pick_row_tile(S, B, D, itemsize, budget)
        n_p = S // tr
        grid = (n_p, B)                              # pe-chunk outer, batch inner
        in_specs = [
            pl.BlockSpec((tr, D), lambda p, b, s: (b * n_p + p, 0)),   # x
            pl.BlockSpec((tr, D), lambda p, b, s: (p, 0)),             # pe (DMA skipped over b)
        ]
        out_spec = pl.BlockSpec((tr, D), lambda p, b, s: (b * n_p + p, 0))
        row_c0, row_c1, col_c0, col_c1 = tr, S, 0, 0
        row_stride = D
        out_shape2 = (R, D)
    else:
        # Fallback: lane-dense (B, S*D) view.
        L = S * D
        x2 = x.reshape(B, L)
        pe2 = pe_sd.reshape(1, L).astype(dtype)
        budget = 4 * 1024 * 1024                     # pe block is a single row
        tB, tL = _pick_lane_tiles(B, L, itemsize, budget)
        nL, nB = pl.cdiv(L, tL), pl.cdiv(B, tB)
        grid = (nL, nB)                              # lane-tile outer, batch inner
        in_specs = [
            pl.BlockSpec((tB, tL), lambda l, b, s: (b, l)),            # x
            pl.BlockSpec((1, tL), lambda l, b, s: (0, l)),             # pe (bcast over rows)
        ]
        out_spec = pl.BlockSpec((tB, tL), lambda l, b, s: (b, l))
        row_c0, row_c1, col_c0, col_c1 = 0, tB, tL, 0
        row_stride = L
        out_shape2 = (B, L)

    kernel = functools.partial(
        _pe_add_dropout_kernel,
        p_drop=float(p_drop), training=bool(training),
        row_c0=row_c0, row_c1=row_c1, col_c0=col_c0, col_c1=col_c1,
        row_stride=row_stride)

    cost = pl.CostEstimate(
        flops=B * S * D,
        transcendentals=0,
        bytes_accessed=(2 * B * S * D + S * D) * itemsize,  # x read, out write, pe once
    )
    seed_arr = jnp.array([seed], dtype=jnp.int32)            # scalar-prefetch (SMEM)

    out2 = pl.pallas_call(
        kernel,
        out_shape=jax.ShapeDtypeStruct(out_shape2, dtype),
        grid_spec=pltpu.PrefetchScalarGridSpec(
            num_scalar_prefetch=1,
            grid=grid,
            in_specs=in_specs,
            out_specs=out_spec,
        ),
        compiler_params=pltpu.CompilerParams(
            # Stateless per-element RNG -> every grid step is independent.
            dimension_semantics=("parallel", "parallel"),
            vmem_limit_bytes=32 * 1024 * 1024,
        ),
        cost_estimate=cost,
    )(seed_arr, x2, pe2)

    return out2.reshape(B, S, D)


if __name__ == "__main__":
    key = jax.random.PRNGKey(0)

    # --- Case 1: row-dense path (d_model multiple of 128) --------------------
    d_model, max_seq_length, batch, seq_len = 128, 16, 2, 8
    pe = make_sinusoidal_pe(d_model, max_seq_length)          # module buffer
    x = jax.random.normal(key, (batch, seq_len, d_model), dtype=jnp.float32)

    out = jax.block_until_ready(positional_encoding(x, pe, p_drop=0.1, training=False))
    ref = x + pe[:, :seq_len, :]
    assert out.shape == x.shape
    assert jnp.allclose(out, ref, atol=1e-6), "row-view eval mismatch"

    # Training mode exercises the in-kernel dropout path.
    # TODO(synk): PyTorch's exact dropout RNG stream is not reproducible; the
    # Bernoulli(1-p) keep + 1/(1-p) rescale semantics are preserved.
    p = 0.1
    out_tr = jax.block_until_ready(
        positional_encoding(x, pe, p_drop=p, training=True, seed=123))
    assert out_tr.shape == x.shape
    ref_scaled = ref / (1.0 - p)
    kept = out_tr != 0
    assert jnp.allclose(jnp.where(kept, out_tr, ref_scaled), ref_scaled, atol=1e-5)
    drop_frac = 1.0 - jnp.mean(kept.astype(jnp.float32))
    assert 0.02 < float(drop_frac) < 0.25, f"dropout rate off: {drop_frac}"

    # --- Case 2: lane-dense fallback path (small d_model) --------------------
    d_model2 = 32
    pe2 = make_sinusoidal_pe(d_model2, max_seq_length)
    x2 = jax.random.normal(jax.random.PRNGKey(1),
                           (batch, seq_len, d_model2), dtype=jnp.float32)
    out2 = jax.block_until_ready(positional_encoding(x2, pe2, p_drop=0.1, training=False))
    ref2 = x2 + pe2[:, :seq_len, :]
    assert jnp.allclose(out2, ref2, atol=1e-6), "lane-view eval mismatch"

    print("KERNEL_OK")
</pallas_src>

<mosaic_0001>
module attributes {stable_mosaic.version = 11 : i64} {
  func.func @_pe_add_dropout_kernel(%arg0: i32, %arg1: i32, %arg2: memref<1xi32, #tpu.memory_space<smem>>, %arg3: memref<8x128xf32, #tpu.memory_space<vmem>>, %arg4: memref<8x128xf32, #tpu.memory_space<vmem>>, %arg5: memref<8x128xf32, #tpu.memory_space<vmem>>) attributes {dimension_semantics = [#tpu.dimension_semantics<parallel>, #tpu.dimension_semantics<parallel>], iteration_bounds = array<i64: 1, 2>, scalar_prefetch = 1 : i64, scratch_operands = 0 : i64, tpu.core_type = #tpu.core_type<tc>, window_params = [{transform_indices = @transform_0, window_bounds = array<i64: 8, 128>}, {transform_indices = @transform_1, window_bounds = array<i64: 8, 128>}, {transform_indices = @transform_2, window_bounds = array<i64: 8, 128>}]} {
    %c0 = arith.constant 0 : index
    %c0_0 = arith.constant 0 : index
    %0 = vector.load %arg3[%c0, %c0_0] : memref<8x128xf32, #tpu.memory_space<vmem>>, vector<8x128xf32>
    %c0_1 = arith.constant 0 : index
    %c0_2 = arith.constant 0 : index
    %1 = vector.load %arg4[%c0_1, %c0_2] : memref<8x128xf32, #tpu.memory_space<vmem>>, vector<8x128xf32>
    %2 = arith.addf %0, %1 : vector<8x128xf32>
    %c0_3 = arith.constant 0 : index
    %c0_4 = arith.constant 0 : index
    %3 = vector.load %arg5[%c0_3, %c0_4] : memref<8x128xf32, #tpu.memory_space<vmem>>, vector<8x128xf32>
    tpu.vector_store %arg5[%c0_3, %c0_4], %2 {strides = array<i32>} : memref<8x128xf32, #tpu.memory_space<vmem>>, vector<8x128xf32>,
    return
  }
  func.func @transform_0(%arg0: i32, %arg1: i32, %arg2: memref<1xi32, #tpu.memory_space<smem>>) -> (i32, i32) {
    %c1_i32 = arith.constant 1 : i32
    %0 = arith.muli %arg1, %c1_i32 : i32
    %1 = arith.addi %0, %arg0 : i32
    %c0_i32 = arith.constant 0 : i32
    %c0_i32_0 = arith.constant 0 : i32
    return %1, %c0_i32 : i32, i32
  }
  func.func @transform_1(%arg0: i32, %arg1: i32, %arg2: memref<1xi32, #tpu.memory_space<smem>>) -> (i32, i32) {
    %c0_i32 = arith.constant 0 : i32
    %c0_i32_0 = arith.constant 0 : i32
    return %arg0, %c0_i32 : i32, i32
  }
  func.func @transform_2(%arg0: i32, %arg1: i32, %arg2: memref<1xi32, #tpu.memory_space<smem>>) -> (i32, i32) {
    %c1_i32 = arith.constant 1 : i32
    %0 = arith.muli %arg1, %c1_i32 : i32
    %1 = arith.addi %0, %arg0 : i32
    %c0_i32 = arith.constant 0 : i32
    %c0_i32_0 = arith.constant 0 : i32
    return %1, %c0_i32 : i32, i32
  }
}

</mosaic_0001>

<llo_original>
// kernel: tpu_custom_call.1
$region0: #{tpu_custom_call.1}
  #allocation0 [shape = 'u32[]', space=smem, size = 0x4, offset = 0x4, fixed_abs, tag = 'smem constant byte address 0x4 - core index']
  #allocation1 [shape = 'u32[144,128]{1,0:T(1,128)}', space=vmem, size = 0x12000, scoped, tag = 'internal scratch']
  #allocation2 [shape = 's32[1]{0}', space=sflag, size = 0x4, scoped, tag = 'scoped memory for tpu_custom_call.1']
  #allocation3 [shape = 's32[1]{0:T(128)S(6)}', space=smem, size = 0x200, scoped, tag = 'prefetched SMEM operand 0']
  %s0 = inlined_call_operand.<no memory space> [shape: s32[1], index: 0, kind: input, shape index: {}]
  %s1 = inlined_call_operand.hbm [shape: f32[16,128], index: 1, kind: input, shape index: {}]
  %s2 = inlined_call_operand.hbm [shape: f32[8,128], index: 2, kind: input, shape index: {}]
  %s3 = inlined_call_operand.hbm [shape: f32[16,128], index: 3, kind: output, shape index: {}]
  %s4 = sld [smem:[#allocation0]]
  $region49: #{tpu_custom_call.1} parent=0
    _
  %s6 = ssub.s32 1, %s4
  %s7 = scalar_select 0, %s6, %s4
  %8 = sst [smem:[#allocation3]] %s0
  $region1: #{tpu_custom_call.1} parent=0
    #allocation4 [shape = 'u8[8192]{0}', space=vmem, size = 0x2000, scoped, tag = 'input window, operand 1']
    #allocation5 [shape = 's32[2]{0}', space=sflag, size = 0x8, scoped, tag = 'scoped memory for tpu_custom_call.1']
    #allocation6 [shape = 's32[2]{0}', space=sflag, size = 0x8, scoped, tag = 'scoped memory for tpu_custom_call.1']
    #allocation7 [shape = 'u8[4096]{0}', space=vmem, size = 0x1000, scoped, tag = 'input window, operand 2, single buffered']
    #allocation8 [shape = 's32[1]{0}', space=sflag, size = 0x4, scoped, tag = 'scoped memory for tpu_custom_call.1']
    #allocation9 [shape = 'u8[8192]{0}', space=vmem, size = 0x2000, scoped, tag = 'output window, operand 0']
    %9 = vsyncpa [#allocation5], 0
    %s10 = scalar_lea.sflag [#allocation5], 1
    %11 = vsyncpa %s10, 0
    %12 = vsyncpa [#allocation8], 0
    %13 = vsyncpa [#allocation6], 0
    %s14 = scalar_lea.sflag [#allocation6], 1
    %15 = vsyncpa %s14, 0
    loop: start=0, step=1, limit=4
    $region2: #{tpu_custom_call.1} parent=1 // loop_pre_header
      _
    $region3: #{tpu_custom_call.1} parent=1 // loop_header
      %s17 = sphi 0, %s21
      %p18 = scmp.ge.s32.totalorder %s17, 4
      %s24 = sphi 0, %s36
      %s25 = sphi 0, %s32
      %s26 = sphi 0, %s24
      %s27 = sphi 0, %s25
      %s28 = sphi 0, %s26
      %s29 = sphi 0, %s27
      %s41 = sphi 0, %s43
      %s44 = sphi 0, %s41
      %s45 = sphi 0, %s44
      %s61 = sphi 0, %s45
      %s67 = sphi 0, %s69
      %s70 = sphi 0, %s67
      %s71 = sphi 0, %s70
      %s87 = sphi 0, %s71
      %s95 = sphi 0, %s97
      %s98 = sphi 0, %s95
      %s99 = sphi 0, %s98
      %s115 = sphi 0, %s99
    $region4: #{tpu_custom_call.1} parent=1 // loop_header_branch
      %20 = sbr.rel (%p18) target = $region8
    $region5: #{tpu_custom_call.1} parent=1 // loop_body
      %s22 = ssub.s32 %s17, 1
      %s23 = ssub.s32 %s17, 2
      %s30 = sadd.s32 1, %s25
      %p31 = scmp.ge.s32.totalorder %s30, 2
      %s32 = scalar_select %p31, 0, %s30
      %s33 = sadd.s32 1, %s24
      %s34 = scalar_select %p31, %s33, %s24
      %p35 = scmp.ge.s32.totalorder %s34, 1
      %s36 = scalar_select %p35, 0, %s34
      %s37 = sadd.s32 %s25, %s24
      %s38 = sadd.s32 %s32, %s36
      %s39 = ssub.s32 %s37, %s38
      %p40 = scmp.eq.s32.totalorder %s39, 0
      %s42 = sadd.s32 %s41, 1
      %s43 = scalar_select %p40, %s41, %s42
      %p46 = pneg %p40
      %p47 = scmp.eq.s32.totalorder %s17, 1
      %p48 = por %p46, %p47
      %p49 = scmp.ne.s32.totalorder %s41, %s44
      %p50 = scmp.eq.s32.totalorder %s17, 0
      %p51 = por %p49, %p50
      %p52 = scmp.ne.s32.totalorder %s41, %s44
      %p53 = scmp.eq.s32.totalorder %s22, 1
      %p54 = por %p52, %p53
      %p55 = scmp.ne.s32.totalorder %s44, %s45
      %p56 = scmp.eq.s32.totalorder %s22, 0
      %p57 = por %p55, %p56
      %p58 = scmp.ne.s32.totalorder %s44, %s45
      %p59 = scmp.eq.s32.totalorder %s23, 1
      %p60 = por %p58, %p59
      %p62 = scmp.ne.s32.totalorder %s45, %s61
      %p63 = scmp.eq.s32.totalorder %s23, 0
      %p64 = por %p62, %p63
      %s65 = ssub.s32 %s24, %s36
      %p66 = scmp.eq.s32.totalorder %s65, 0
      %s68 = sadd.s32 %s67, 1
      %s69 = scalar_select %p66, %s67, %s68
      %p72 = pneg %p66
      %p73 = scmp.eq.s32.totalorder %s17, 1
      %p74 = por %p72, %p73
      %p75 = scmp.ne.s32.totalorder %s67, %s70
      %p76 = scmp.eq.s32.totalorder %s17, 0
      %p77 = por %p75, %p76
      %p78 = scmp.ne.s32.totalorder %s67, %s70
      %p79 = scmp.eq.s32.totalorder %s22, 1
      %p80 = por %p78, %p79
      %p81 = scmp.ne.s32.totalorder %s70, %s71
      %p82 = scmp.eq.s32.totalorder %s22, 0
      %p83 = por %p81, %p82
      %p84 = scmp.ne.s32.totalorder %s70, %s71
      %p85 = scmp.eq.s32.totalorder %s23, 1
      %p86 = por %p84, %p85
      %p88 = scmp.ne.s32.totalorder %s71, %s87
      %p89 = scmp.eq.s32.totalorder %s23, 0
      %p90 = por %p88, %p89
      %s91 = sadd.s32 %s25, %s24
      %s92 = sadd.s32 %s32, %s36
      %s93 = ssub.s32 %s91, %s92
      %p94 = scmp.eq.s32.totalorder %s93, 0
      %s96 = sadd.s32 %s95, 1
      %s97 = scalar_select %p94, %s95, %s96
      %p100 = pneg %p94
      %p101 = scmp.eq.s32.totalorder %s17, 1
      %p102 = por %p100, %p101
      %p103 = scmp.ne.s32.totalorder %s95, %s98
      %p104 = scmp.eq.s32.totalorder %s17, 0
      %p105 = por %p103, %p104
      %p106 = scmp.ne.s32.totalorder %s95, %s98
      %p107 = scmp.eq.s32.totalorder %s22, 1
      %p108 = por %p106, %p107
      %p109 = scmp.ne.s32.totalorder %s98, %s99
      %p110 = scmp.eq.s32.totalorder %s22, 0
      %p111 = por %p109, %p110
      %p112 = scmp.ne.s32.totalorder %s98, %s99
      %p113 = scmp.eq.s32.totalorder %s23, 1
      %p114 = por %p112, %p113
      %p116 = scmp.ne.s32.totalorder %s99, %s115
      %p117 = scmp.eq.s32.totalorder %s23, 0
      %p118 = por %p116, %p117
      %p119 = scmp.le.s32.totalorder 1, %s17
      %p120 = scmp.lt.s32.totalorder %s17, 3
      %p121 = pnand %p119, %p120
      %p122 = pneg %p121
      // Predicated region
      $region9: #{tpu_custom_call.1} parent=5 // pred_check
        _
      $region10: #{tpu_custom_call.1} parent=5 // pred_check_branch
        %124 = sbr.rel (%p121) target = $region12
      $region11: #{tpu_custom_call.1} parent=5 // pred_region
        %s125 = ssub.s32 %s17, 1
        // Predicated region
        $region13: #{tpu_custom_call.1} parent=11 // pred_check
          %p126 = pneg %p83
        $region14: #{tpu_custom_call.1} parent=11 // pred_check_branch
          %128 = sbr.rel (%p126) target = $region16
        $region15: #{tpu_custom_call.1} parent=11 // pred_region
          %s130 = ssub.s32 128, 128
          %131 = vsyncadd [#allocation8], %s130
          %s132 = smul.addr %s26, 128
          %s133 = scalar_lea.hbm %s2, %s132
          %s135 = sshll.u32 [#allocation7], 4
          %s136 = int_to_ptr.vmem [resolvable:$true] %s135
          %138 = dma.hbm_to_vmem [thread:$0]  %s133, 128, %s136, [#allocation8]
        $region16: #{tpu_custom_call.1} parent=11 // pred_fallthru
          _
      $region12: #{tpu_custom_call.1} parent=5 // pred_fallthru
        _
      %p139 = scmp.lt.s32.totalorder %s17, 2
      // Predicated region
      $region17: #{tpu_custom_call.1} parent=5 // pred_check
        %p140 = pneg %p139
      $region18: #{tpu_custom_call.1} parent=5 // pred_check_branch
        %142 = sbr.rel (%p140) target = $region20
      $region19: #{tpu_custom_call.1} parent=5 // pred_region
        // Predicated region
        $region21: #{tpu_custom_call.1} parent=19 // pred_check
          %p143 = pneg %p51
        $region22: #{tpu_custom_call.1} parent=19 // pred_check_branch
          %145 = sbr.rel (%p143) target = $region24
        $region23: #{tpu_custom_call.1} parent=19 // pred_region
          %s146 = sand.u32 %s41, 1
          %s147 = scalar_lea.sflag [#allocation5], %s146
          %s148 = sand.u32 %s41, 1
          %s149 = smul.addr %s148, 8
          %s150 = scalar_lea.vmem [#allocation4], %s149
          %s151 = sadd.s32 %s25, %s24
          %s153 = ssub.s32 128, 128
          %154 = vsyncadd %s147, %s153
          %s155 = smul.addr %s151, 128
          %s156 = scalar_lea.hbm %s1, %s155
          %s158 = sshll.u32 %s150, 4
          %s159 = int_to_ptr.vmem [resolvable:$true] %s158
          %161 = dma.hbm_to_vmem [thread:$0]  %s156, 128, %s159, %s147
        $region24: #{tpu_custom_call.1} parent=19 // pred_fallthru
          _
      $region20: #{tpu_custom_call.1} parent=5 // pred_fallthru
        _
      %p162 = scmp.le.s32.totalorder 1, %s17
      %p163 = scmp.lt.s32.totalorder %s17, 3
      %p164 = pnand %p162, %p163
      %p165 = pneg %p164
      // Predicated region
      $region25: #{tpu_custom_call.1} parent=5 // pred_check
        _
      $region26: #{tpu_custom_call.1} parent=5 // pred_check_branch
        %167 = sbr.rel (%p164) target = $region28
      $region27: #{tpu_custom_call.1} parent=5 // pred_region
        %s168 = ssub.s32 %s17, 1
        %s169 = sand.u32 %s44, 1
        %s170 = scalar_lea.sflag [#allocation5], %s169
        %s171 = sand.u32 %s44, 1
        %s172 = smul.addr %s171, 8
        %s173 = scalar_lea.vmem [#allocation4], %s172
        // Predicated region
        $region29: #{tpu_custom_call.1} parent=27 // pred_check
          %p174 = pneg %p57
        $region30: #{tpu_custom_call.1} parent=27 // pred_check_branch
          %176 = sbr.rel (%p174) target = $region32
        $region31: #{tpu_custom_call.1} parent=27 // pred_region
          %177 = dma.done %s170, 128
        $region32: #{tpu_custom_call.1} parent=27 // pred_fallthru
          _
        // Predicated region
        $region33: #{tpu_custom_call.1} parent=27 // pred_check
          %p178 = pneg %p83
        $region34: #{tpu_custom_call.1} parent=27 // pred_check_branch
          %180 = sbr.rel (%p178) target = $region36
        $region35: #{tpu_custom_call.1} parent=27 // pred_region
          %181 = dma.done [#allocation8], 128
        $region36: #{tpu_custom_call.1} parent=27 // pred_fallthru
          _
        %s182 = sand.u32 %s44, 1
        %s183 = scalar_lea.sflag [#allocation5], %s182
        %s184 = sand.u32 %s44, 1
        %s185 = smul.addr %s184, 8
        %s186 = scalar_lea.vmem [#allocation4], %s185
        %p187 = pneg %p57
        %p188 = pneg %p54
        %p189 = pneg %p83
        %p190 = pneg %p80
        %p191 = pneg %p111
        %p192 = pneg %p108
        %s193 = sand.u32 %s98, 1
        %s194 = scalar_lea.sflag [#allocation6], %s193
        %s195 = sand.u32 %s98, 1
        %s196 = smul.addr %s195, 8
        %s197 = scalar_lea.vmem [#allocation9], %s196
        %s198 = sadd.s32 %s27, %s26
        %s199 = sadd.s32 %s27, %s26
        %v200 = vld [vmem:[%s173] sm:$0xff]
        %v201 = vld [vmem:[#allocation7] sm:$0xff]
        %v202 = vadd.f32 %v200, %v201
        %203 = vst [vmem:[%s197] sm:$0xff] %v202
        %s204 = sand.u32 %s98, 1
        %s205 = scalar_lea.sflag [#allocation6], %s204
        %s206 = sand.u32 %s98, 1
        %s207 = smul.addr %s206, 8
        %s208 = scalar_lea.vmem [#allocation9], %s207
        // Predicated region
        $region37: #{tpu_custom_call.1} parent=27 // pred_check
          %p209 = pneg %p108
        $region38: #{tpu_custom_call.1} parent=27 // pred_check_branch
          %211 = sbr.rel (%p209) target = $region40
        $region39: #{tpu_custom_call.1} parent=27 // pred_region
          %s212 = sadd.s32 %s27, %s26
          %s214 = ssub.s32 128, 128
          %215 = vsyncadd %s205, %s214
          %s216 = smul.addr %s212, 128
          %s217 = scalar_lea.hbm %s3, %s216
          %s219 = sshll.u32 %s208, 4
          %s220 = int_to_ptr.vmem [resolvable:$true] %s219
          %222 = dma.vmem_to_hbm [thread:$0]  %s220, 128, %s217, %s205
        $region40: #{tpu_custom_call.1} parent=27 // pred_fallthru
          _
      $region28: #{tpu_custom_call.1} parent=5 // pred_fallthru
        _
      %p223 = scmp.le.s32.totalorder 2, %s17
      // Predicated region
      $region41: #{tpu_custom_call.1} parent=5 // pred_check
        %p224 = pneg %p223
      $region42: #{tpu_custom_call.1} parent=5 // pred_check_branch
        %226 = sbr.rel (%p224) target = $region44
      $region43: #{tpu_custom_call.1} parent=5 // pred_region
        %s227 = ssub.s32 %s17, 2
        // Predicated region
        $region45: #{tpu_custom_call.1} parent=43 // pred_check
          %p228 = pneg %p114
        $region46: #{tpu_custom_call.1} parent=43 // pred_check_branch
          %230 = sbr.rel (%p228) target = $region48
        $region47: #{tpu_custom_call.1} parent=43 // pred_region
          %s231 = sand.u32 %s99, 1
          %s232 = scalar_lea.sflag [#allocation6], %s231
          %s233 = sand.u32 %s99, 1
          %s234 = smul.addr %s233, 8
          %s235 = scalar_lea.vmem [#allocation9], %s234
          %236 = dma.done %s232, 128
        $region48: #{tpu_custom_call.1} parent=43 // pred_fallthru
          _
      $region44: #{tpu_custom_call.1} parent=5 // pred_fallthru
        _
    $region6: #{tpu_custom_call.1} parent=1 // loop_footer
      %s21 = sadd.s32 1, %s17
    $region7: #{tpu_custom_call.1} parent=1 // loop_footer_branch
      %16 = sbr.rel target = $region3
    $region8: #{tpu_custom_call.1} parent=1 // loop_exit
      _
    %237 = vsyncpa [#allocation5], 1
    %s238 = scalar_lea.sflag [#allocation5], 1
    %239 = vsyncpa %s238, 1
    %240 = vsyncpa [#allocation8], 1
    %241 = vsyncpa [#allocation6], 1
    %s242 = scalar_lea.sflag [#allocation6], 1
    %243 = vsyncpa %s242, 1

</llo_original>
